<compile_context>
chip_gen: v5e
topology: v5e:2x2
jax: 0.10.0
libtpu: 0.0.40
codegen_flags: <defaults>
</compile_context>

<pallas_src>
import jax
import jax.numpy as jnp
from jax import lax
from jax.experimental import pallas as pl
from jax.experimental.pallas import tpu as pltpu

_MIB = 1 << 20
_FUSED_VMEM_MAX = 48 * _MIB   # stay comfortably inside v7x's 64 MiB physical VMEM


def _round_up(x, m):
    return ((x + m - 1) // m) * m


def _pick_tile_ne(ne, tile_ne):
    """ne tile size: MXU-aligned, and >= 2 tiles when ne > 128 (v7x has 2 TCs)."""
    tn = min(tile_ne, ne)
    if ne > 128:
        tn = min(tn, _round_up(pl.cdiv(ne, 2), 128))
    return tn


def _vmem_limit(estimate_bytes):
    return int(min(128 * _MIB, max(32 * _MIB, 1.25 * estimate_bytes)))


# --------------------------------------------------------------------------- kernels
def _eidense_fused_kernel(x_ref, wex_ref, wix_ref, wei_ref, b_ref, o_ref, w_eff_ref):
    """One (ne_tile, batch_tile) grid step; W_eff cached in VMEM across batch tiles."""
    # W_eff is batch-independent: recompute only when a new ne tile starts
    # (batch is the innermost grid axis, so batch_tile_id == 0 marks that).
    @pl.when(pl.program_id(1) == 0)
    def _():
        inhib = jnp.dot(wei_ref[...], wix_ref[...],
                        preferred_element_type=jnp.float32)
        w_eff_ref[...] = (wex_ref[...].astype(jnp.float32) - inhib).astype(
            w_eff_ref.dtype)

    # z = x @ W_eff.T with no materialized transpose: contract the last dims.
    z = lax.dot_general(
        x_ref[...], w_eff_ref[...],
        dimension_numbers=(((1,), (1,)), ((), ())),
        preferred_element_type=jnp.float32)
    # Lane-dense (1, tn) bias broadcasts over the batch rows on the VPU.
    o_ref[...] = (z + b_ref[...].astype(jnp.float32)).astype(o_ref.dtype)


def _eidense_small_batch_kernel(x_ref, wex_ref, wix_ref, wei_ref, b_ref, o_ref):
    """z = x @ Wex.T - (x @ Wix.T) @ Wei.T + b  (no W_eff materialisation)."""
    x = x_ref[...]
    ze = lax.dot_general(x, wex_ref[...],
                         dimension_numbers=(((1,), (1,)), ((), ())),
                         preferred_element_type=jnp.float32)
    xi = lax.dot_general(x, wix_ref[...],
                         dimension_numbers=(((1,), (1,)), ((), ())),
                         preferred_element_type=jnp.float32)
    wei = wei_ref[...]
    zi = lax.dot_general(xi.astype(wei.dtype), wei,
                         dimension_numbers=(((1,), (1,)), ((), ())),
                         preferred_element_type=jnp.float32)
    o_ref[...] = (ze - zi + b_ref[...].astype(jnp.float32)).astype(o_ref.dtype)


def _w_eff_kernel(wex_ref, wix_ref, wei_ref, o_ref):
    """Pass 1 of the two-pass path: W_eff = Wex - Wei @ Wix, tiled over (ne, K)."""
    inhib = jnp.dot(wei_ref[...], wix_ref[...], preferred_element_type=jnp.float32)
    o_ref[...] = (wex_ref[...].astype(jnp.float32) - inhib).astype(o_ref.dtype)


def _xwT_bias_kernel(x_ref, w_ref, b_ref, o_ref, acc_ref):
    """Pass 2 of the two-pass path: z = x @ W_eff.T + b, K-tiled with f32 accumulator."""
    @pl.when(pl.program_id(2) == 0)
    def _():
        acc_ref[...] = jnp.zeros_like(acc_ref)

    acc_ref[...] += lax.dot_general(
        x_ref[...], w_ref[...],
        dimension_numbers=(((1,), (1,)), ((), ())),
        preferred_element_type=jnp.float32)

    @pl.when(pl.program_id(2) == pl.num_programs(2) - 1)
    def _():
        o_ref[...] = (acc_ref[...] + b_ref[...].astype(jnp.float32)).astype(o_ref.dtype)


# --------------------------------------------------------------------------- wrapper
def eidense_forward(x, wex, wix, wei, b, *,
                    tile_batch=256, tile_ne=256, tile_k=512,
                    compute_dtype=jnp.bfloat16, w_eff_dtype=None,
                    small_batch_threshold=64, force_two_pass=False):
    """out = ((Wex - Wei @ Wix) @ x.T + b).T   -> shape (batch, ne)."""
    batch, n_input = x.shape
    ne, n_input_w = wex.shape
    ni, n_input_i = wix.shape
    assert n_input_w == n_input and n_input_i == n_input
    assert wei.shape == (ne, ni)
    assert b.shape in ((ne, 1), (ne,))

    out_dtype = x.dtype
    if w_eff_dtype is None:
        w_eff_dtype = compute_dtype

    # bf16 (default) feeds the MXU at native rate on v5e/v6e/v7x and halves DMA/VMEM
    # bytes; accumulation stays f32 inside the kernels.
    xc = x.astype(compute_dtype)
    wexc = wex.astype(compute_dtype)
    wixc = wix.astype(compute_dtype)
    weic = wei.astype(compute_dtype)
    b_row = jnp.reshape(b, (1, ne)).astype(jnp.float32)   # lane-dense bias

    tn = _pick_tile_ne(ne, tile_ne)
    tb = min(tile_batch, batch)
    ne_tiles = pl.cdiv(ne, tn)

    cbytes = jnp.dtype(compute_dtype).itemsize
    obytes = jnp.dtype(out_dtype).itemsize
    sbytes = jnp.dtype(w_eff_dtype).itemsize

    matmul_flops = 2 * batch * ne * n_input
    w_eff_flops = 2 * ne * ni * n_input

    # ---------------------------------------------------------------- small batch
    if not force_two_pass and batch <= small_batch_threshold:
        vmem_est = 2 * ((batch + tn + ni) * n_input * cbytes
                        + tn * ni * cbytes + tn * 4 + batch * tn * obytes)
        bytes_accessed = ((batch * n_input * ne_tiles + ne * n_input
                           + ni * n_input + ne * ni) * cbytes
                          + ne * 4 + batch * ne * obytes)
        return pl.pallas_call(
            _eidense_small_batch_kernel,
            out_shape=jax.ShapeDtypeStruct((batch, ne), out_dtype),
            grid_spec=pltpu.PrefetchScalarGridSpec(
                num_scalar_prefetch=0,
                grid=(ne_tiles,),
                in_specs=[
                    pl.BlockSpec((batch, n_input), lambda i: (0, 0)),   # x (resident)
                    pl.BlockSpec((tn, n_input), lambda i: (i, 0)),      # Wex
                    pl.BlockSpec((ni, n_input), lambda i: (0, 0)),      # Wix (resident)
                    pl.BlockSpec((tn, ni), lambda i: (i, 0)),           # Wei
                    pl.BlockSpec((1, tn), lambda i: (0, i)),            # bias
                ],
                out_specs=pl.BlockSpec((batch, tn), lambda i: (0, i)),
            ),
            compiler_params=pltpu.CompilerParams(
                dimension_semantics=("parallel",),
                vmem_limit_bytes=_vmem_limit(vmem_est),
            ),
            cost_estimate=pl.CostEstimate(
                flops=int(matmul_flops + 2 * batch * ni * n_input * ne_tiles
                          + 2 * batch * ne * ni),
                transcendentals=0,
                bytes_accessed=int(bytes_accessed)),
        )(xc, wexc, wixc, weic, b_row)

    # -------------------------------------------------------------------- fused
    fused_vmem = (2 * ((tb + tn + ni) * n_input * cbytes
                       + tn * ni * cbytes + tn * 4 + tb * tn * obytes)
                  + tn * n_input * sbytes)

    if not force_two_pass and fused_vmem <= _FUSED_VMEM_MAX:
        batch_tiles = pl.cdiv(batch, tb)
        bytes_accessed = ((batch * n_input * ne_tiles + ne * n_input
                           + ni * n_input + ne * ni) * cbytes
                          + ne * 4 + batch * ne * obytes)
        return pl.pallas_call(
            _eidense_fused_kernel,
            out_shape=jax.ShapeDtypeStruct((batch, ne), out_dtype),
            grid_spec=pltpu.PrefetchScalarGridSpec(
                num_scalar_prefetch=0,
                grid=(ne_tiles, batch_tiles),            # ne outer, batch innermost
                in_specs=[
                    pl.BlockSpec((tb, n_input), lambda i, j: (j, 0)),   # x
                    pl.BlockSpec((tn, n_input), lambda i, j: (i, 0)),   # Wex
                    pl.BlockSpec((ni, n_input), lambda i, j: (0, 0)),   # Wix (resident)
                    pl.BlockSpec((tn, ni), lambda i, j: (i, 0)),        # Wei
                    pl.BlockSpec((1, tn), lambda i, j: (0, i)),         # bias
                ],
                out_specs=pl.BlockSpec((tb, tn), lambda i, j: (j, i)),
                scratch_shapes=[pltpu.VMEM((tn, n_input), w_eff_dtype)],
            ),
            compiler_params=pltpu.CompilerParams(
                # ne tiles are independent -> parallel (shards across v7x's 2 TCs);
                # the batch axis carries the W_eff scratch -> arbitrary.
                dimension_semantics=("parallel", "arbitrary"),
                vmem_limit_bytes=_vmem_limit(fused_vmem),
            ),
            cost_estimate=pl.CostEstimate(
                flops=int(matmul_flops + w_eff_flops),
                transcendentals=0,
                bytes_accessed=int(bytes_accessed)),
        )(xc, wexc, wixc, weic, b_row)

    # ------------------------------------------------------------------ two-pass
    # Large n_input (or forced): materialise W_eff to HBM with a tiled pallas_call,
    # then run a K-tiled matmul with an f32 VMEM accumulator (k innermost).
    tk = min(tile_k, n_input)
    k_pad = _round_up(n_input, tk)
    if k_pad != n_input:
        # Zero-pad K so partial K tiles never feed garbage into the accumulator.
        xc = jnp.pad(xc, ((0, 0), (0, k_pad - n_input)))
        wexc = jnp.pad(wexc, ((0, 0), (0, k_pad - n_input)))
        wixc = jnp.pad(wixc, ((0, 0), (0, k_pad - n_input)))
    k_tiles = k_pad // tk

    w_eff_vmem = 2 * ((tn + ni) * tk * cbytes + tn * ni * cbytes + tn * tk * sbytes)
    w_eff = pl.pallas_call(
        _w_eff_kernel,
        out_shape=jax.ShapeDtypeStruct((ne, k_pad), w_eff_dtype),
        grid_spec=pltpu.PrefetchScalarGridSpec(
            num_scalar_prefetch=0,
            grid=(ne_tiles, k_tiles),
            in_specs=[
                pl.BlockSpec((tn, tk), lambda i, k: (i, k)),    # Wex
                pl.BlockSpec((ni, tk), lambda i, k: (0, k)),    # Wix
                pl.BlockSpec((tn, ni), lambda i, k: (i, 0)),    # Wei
            ],
            out_specs=pl.BlockSpec((tn, tk), lambda i, k: (i, k)),
        ),
        compiler_params=pltpu.CompilerParams(
            dimension_semantics=("parallel", "parallel"),
            vmem_limit_bytes=_vmem_limit(w_eff_vmem),
        ),
        cost_estimate=pl.CostEstimate(
            flops=int(w_eff_flops), transcendentals=0,
            bytes_accessed=int((ne * k_pad + ni * k_pad * ne_tiles + ne * ni) * cbytes
                               + ne * k_pad * sbytes)),
    )(wexc, wixc, weic)

    batch_tiles = pl.cdiv(batch, tb)
    z_vmem = (2 * ((tb + tn) * tk * cbytes + tn * 4 + tb * tn * obytes)
              + tb * tn * 4)
    return pl.pallas_call(
        _xwT_bias_kernel,
        out_shape=jax.ShapeDtypeStruct((batch, ne), out_dtype),
        grid_spec=pltpu.PrefetchScalarGridSpec(
            num_scalar_prefetch=0,
            grid=(ne_tiles, batch_tiles, k_tiles),   # k innermost carries the accumulator
            in_specs=[
                pl.BlockSpec((tb, tk), lambda i, j, k: (j, k)),     # x
                pl.BlockSpec((tn, tk), lambda i, j, k: (i, k)),     # W_eff
                pl.BlockSpec((1, tn), lambda i, j, k: (0, i)),      # bias
            ],
            out_specs=pl.BlockSpec((tb, tn), lambda i, j, k: (j, i)),
            scratch_shapes=[pltpu.VMEM((tb, tn), jnp.float32)],
        ),
        compiler_params=pltpu.CompilerParams(
            dimension_semantics=("parallel", "parallel", "arbitrary"),
            vmem_limit_bytes=_vmem_limit(z_vmem),
        ),
        cost_estimate=pl.CostEstimate(
            flops=int(matmul_flops), transcendentals=0,
            bytes_accessed=int((batch * k_pad * ne_tiles + ne * k_pad + ne) * cbytes
                               + batch * ne * obytes)),
    )(xc, w_eff, b_row)


# ------------------------------------------------------------------------- test
def eidense_reference(x, wex, wix, wei, b):
    w_eff = wex - wei @ wix
    return (w_eff @ x.T + jnp.reshape(b, (-1, 1))).T


def _run_case(name, batch, n_input, ne, ni, *, atol, rtol, **kwargs):
    key = jax.random.PRNGKey(0)
    kx, kex, kix, kei, kb = jax.random.split(key, 5)
    x = jax.random.normal(kx, (batch, n_input), dtype=jnp.float32)
    wex = jax.random.uniform(kex, (ne, n_input), dtype=jnp.float32) * 0.1
    wix = jax.random.uniform(kix, (ni, n_input), dtype=jnp.float32) * 0.1
    wei = jax.random.uniform(kei, (ne, ni), dtype=jnp.float32) * 0.1
    b = jax.random.normal(kb, (ne, 1), dtype=jnp.float32) * 0.01

    out = eidense_forward(x, wex, wix, wei, b, **kwargs)
    out = jax.block_until_ready(out)
    ref = eidense_reference(x, wex, wix, wei, b)

    assert out.shape == (batch, ne), (name, out.shape)
    max_err = float(jnp.max(jnp.abs(out - ref)))
    assert jnp.allclose(out, ref, atol=atol, rtol=rtol), (
        f"{name}: max abs err {max_err}")


if __name__ == "__main__":
    # 1) Toy shapes (small-batch algebraic path, default bf16 MXU feeding).
    _run_case("toy_small_batch_bf16", batch=2, n_input=32, ne=16, ni=8,
              atol=5e-2, rtol=5e-2)
    # 2) Small-batch path, multi ne-tile grid, f32 compute (tight check).
    _run_case("small_batch_f32", batch=16, n_input=128, ne=256, ni=32,
              compute_dtype=jnp.float32, atol=1e-4, rtol=1e-4)
    # 3) Fused path, f32 compute, multi-tile (ne_tiles=3, batch_tiles=2) grid:
    #    exercises the W_eff hoisting / reuse across batch tiles.
    _run_case("fused_f32", batch=256, n_input=256, ne=384, ni=64,
              tile_batch=128, tile_ne=128, compute_dtype=jnp.float32,
              atol=1e-3, rtol=1e-3)
    # 4) Fused path with default bf16 inputs + bf16 W_eff scratch (f32 accumulation).
    _run_case("fused_bf16", batch=128, n_input=256, ne=256, ni=64,
              atol=2e-1, rtol=5e-2)
    # 5) Two-pass path (W_eff to HBM + K-tiled accumulator), forced at small shapes,
    #    with K not a multiple of tile_k to exercise the zero-padding.
    _run_case("two_pass_f32", batch=128, n_input=320, ne=256, ni=32,
              tile_k=128, compute_dtype=jnp.float32, force_two_pass=True,
              atol=1e-3, rtol=1e-3)

    print("KERNEL_OK")
</pallas_src>

<mosaic_0001>
module attributes {stable_mosaic.version = 11 : i64} {
  func.func @_eidense_small_batch_kernel(%arg0: i32, %arg1: memref<2x32xbf16, #tpu.memory_space<vmem>>, %arg2: memref<16x32xbf16, #tpu.memory_space<vmem>>, %arg3: memref<8x32xbf16, #tpu.memory_space<vmem>>, %arg4: memref<16x8xbf16, #tpu.memory_space<vmem>>, %arg5: memref<1x16xf32, #tpu.memory_space<vmem>>, %arg6: memref<2x16xf32, #tpu.memory_space<vmem>>) attributes {dimension_semantics = [#tpu.dimension_semantics<parallel>], iteration_bounds = array<i64: 1>, scalar_prefetch = 0 : i64, scratch_operands = 0 : i64, tpu.core_type = #tpu.core_type<tc>, window_params = [{pipeline_mode = #tpu.pipeline_mode<synchronous>, transform_indices = @transform_0, window_bounds = array<i64: 2, 32>}, {transform_indices = @transform_1, window_bounds = array<i64: 16, 32>}, {pipeline_mode = #tpu.pipeline_mode<synchronous>, transform_indices = @transform_2, window_bounds = array<i64: 8, 32>}, {transform_indices = @transform_3, window_bounds = array<i64: 16, 8>}, {transform_indices = @transform_4, window_bounds = array<i64: 1, 16>}, {transform_indices = @transform_5, window_bounds = array<i64: 2, 16>}]} {
    %c0 = arith.constant 0 : index
    %c0_0 = arith.constant 0 : index
    %0 = vector.load %arg1[%c0, %c0_0] : memref<2x32xbf16, #tpu.memory_space<vmem>>, vector<2x32xbf16>
    %c0_1 = arith.constant 0 : index
    %c0_2 = arith.constant 0 : index
    %1 = vector.load %arg2[%c0_1, %c0_2] : memref<16x32xbf16, #tpu.memory_space<vmem>>, vector<16x32xbf16>
    %cst = arith.constant dense<0.000000e+00> : vector<2x16xf32>
    %2 = tpu.matmul %0, %1, %cst {dimension_numbers = #tpu.dot_dimension_numbers<[1], [1], [0], [0], [0, 0, 1, 0], [], []>} : vector<2x32xbf16>, vector<16x32xbf16>, vector<2x16xf32> -> vector<2x16xf32>
    %c0_3 = arith.constant 0 : index
    %c0_4 = arith.constant 0 : index
    %3 = vector.load %arg3[%c0_3, %c0_4] : memref<8x32xbf16, #tpu.memory_space<vmem>>, vector<8x32xbf16>
    %cst_5 = arith.constant dense<0.000000e+00> : vector<2x8xf32>
    %4 = tpu.matmul %0, %3, %cst_5 {dimension_numbers = #tpu.dot_dimension_numbers<[1], [1], [0], [0], [0, 0, 1, 0], [], []>} : vector<2x32xbf16>, vector<8x32xbf16>, vector<2x8xf32> -> vector<2x8xf32>
    %c0_6 = arith.constant 0 : index
    %c0_7 = arith.constant 0 : index
    %5 = vector.load %arg4[%c0_6, %c0_7] : memref<16x8xbf16, #tpu.memory_space<vmem>>, vector<16x8xbf16>
    %6 = arith.truncf %4 : vector<2x8xf32> to vector<2x8xbf16>
    %cst_8 = arith.constant dense<0.000000e+00> : vector<2x16xf32>
    %7 = tpu.matmul %6, %5, %cst_8 {dimension_numbers = #tpu.dot_dimension_numbers<[1], [1], [0], [0], [0, 0, 1, 0], [], []>} : vector<2x8xbf16>, vector<16x8xbf16>, vector<2x16xf32> -> vector<2x16xf32>
    %8 = arith.subf %2, %7 : vector<2x16xf32>
    %c0_9 = arith.constant 0 : index
    %c0_10 = arith.constant 0 : index
    %9 = vector.load %arg5[%c0_9, %c0_10] : memref<1x16xf32, #tpu.memory_space<vmem>>, vector<1x16xf32>
    %10 = vector.broadcast %9 : vector<1x16xf32> to vector<2x16xf32>
    %11 = arith.addf %8, %10 : vector<2x16xf32>
    %c0_11 = arith.constant 0 : index
    %c0_12 = arith.constant 0 : index
    %12 = vector.load %arg6[%c0_11, %c0_12] : memref<2x16xf32, #tpu.memory_space<vmem>>, vector<2x16xf32>
    tpu.vector_store %arg6[%c0_11, %c0_12], %11 {strides = array<i32>} : memref<2x16xf32, #tpu.memory_space<vmem>>, vector<2x16xf32>,
    return
  }
  func.func @transform_0(%arg0: i32) -> (i32, i32) {
    %c0_i32 = arith.constant 0 : i32
    %c0_i32_0 = arith.constant 0 : i32
    %c0_i32_1 = arith.constant 0 : i32
    return %c0_i32, %c0_i32_0 : i32, i32
  }
  func.func @transform_1(%arg0: i32) -> (i32, i32) {
    %c0_i32 = arith.constant 0 : i32
    %c0_i32_0 = arith.constant 0 : i32
    return %arg0, %c0_i32 : i32, i32
  }
  func.func @transform_2(%arg0: i32) -> (i32, i32) {
    %c0_i32 = arith.constant 0 : i32
    %c0_i32_0 = arith.constant 0 : i32
    %c0_i32_1 = arith.constant 0 : i32
    return %c0_i32, %c0_i32_0 : i32, i32
  }
  func.func @transform_3(%arg0: i32) -> (i32, i32) {
    %c0_i32 = arith.constant 0 : i32
    %c0_i32_0 = arith.constant 0 : i32
    return %arg0, %c0_i32 : i32, i32
  }
  func.func @transform_4(%arg0: i32) -> (i32, i32) {
    %c0_i32 = arith.constant 0 : i32
    %c0_i32_0 = arith.constant 0 : i32
    return %c0_i32, %arg0 : i32, i32
  }
  func.func @transform_5(%arg0: i32) -> (i32, i32) {
    %c0_i32 = arith.constant 0 : i32
    %c0_i32_0 = arith.constant 0 : i32
    return %c0_i32, %arg0 : i32, i32
  }
}

</mosaic_0001>

<llo_original>
// kernel: tpu_custom_call.1
$region0: #{tpu_custom_call.1}
  #allocation0 [shape = 'u32[]', space=smem, size = 0x4, offset = 0x4, fixed_abs, tag = 'smem constant byte address 0x4 - core index']
  #allocation1 [shape = 'u32[72,128]{1,0:T(1,128)}', space=vmem, size = 0x9000, scoped, tag = 'internal scratch']
  %s0 = inlined_call_operand.hbm [shape: bf16[2,32], index: 0, kind: input, shape index: {}]
  %s1 = inlined_call_operand.vmem [shape: bf16[16,32], index: 1, kind: input, shape index: {}]
  %s2 = inlined_call_operand.vmem [shape: bf16[8,32], index: 2, kind: input, shape index: {}]
  %s3 = inlined_call_operand.vmem [shape: bf16[16,8], index: 3, kind: input, shape index: {}]
  %s4 = inlined_call_operand.vmem [shape: f32[1,16], index: 4, kind: input, shape index: {}]
  %s5 = inlined_call_operand.hbm [shape: f32[2,16], index: 5, kind: output, shape index: {}]
  %s6 = sld [smem:[#allocation0]]
  $region34: #{tpu_custom_call.1} parent=0
    _
  %s8 = ssub.s32 1, %s6
  %s9 = scalar_select 0, %s8, %s6
  $region1: #{tpu_custom_call.1} parent=0
    #allocation2 [shape = 'u8[512]{0}', space=vmem, size = 0x400, scoped, tag = 'input window, operand 0, single buffered']
    #allocation3 [shape = 's32[1]{0}', space=sflag, size = 0x4, scoped, tag = 'scoped memory for tpu_custom_call.1']
    #allocation4 [shape = 's32[1]{0}', space=sflag, size = 0x4, scoped, tag = 'scoped memory for tpu_custom_call.1']
    #allocation5 [shape = 'u8[1024]{0}', space=vmem, size = 0x400, scoped, tag = 'output window, operand 0, single buffered']
    %10 = vsyncpa [#allocation3], 0
    %11 = vsyncpa [#allocation4], 0
    // Predicated region
    $region2: #{tpu_custom_call.1} parent=1 // pred_check
      _
    $region3: #{tpu_custom_call.1} parent=1 // pred_check_branch
      %13 = sbr.rel (0) target = $region5
    $region4: #{tpu_custom_call.1} parent=1 // pred_region
      %15 = vsyncadd [#allocation3], 0
      %s17 = sshll.u32 %s0, 4
      %s18 = int_to_ptr.hbm [resolvable:$true] %s17
      %s19 = sshll.u32 [#allocation2], 4
      %s20 = int_to_ptr.vmem [resolvable:$true] %s19
      %22 = dma.hbm_to_vmem [thread:$0]  %s18, 16, %s20, [#allocation3]
    $region5: #{tpu_custom_call.1} parent=1 // pred_fallthru
      _
    // Predicated region
    $region6: #{tpu_custom_call.1} parent=1 // pred_check
      _
    $region7: #{tpu_custom_call.1} parent=1 // pred_check_branch
      %24 = sbr.rel (0) target = $region9
    $region8: #{tpu_custom_call.1} parent=1 // pred_region
      _
    $region9: #{tpu_custom_call.1} parent=1 // pred_fallthru
      _
    // Predicated region
    $region10: #{tpu_custom_call.1} parent=1 // pred_check
      _
    $region11: #{tpu_custom_call.1} parent=1 // pred_check_branch
      %26 = sbr.rel (0) target = $region13
    $region12: #{tpu_custom_call.1} parent=1 // pred_region
      _
    $region13: #{tpu_custom_call.1} parent=1 // pred_fallthru
      _
    // Predicated region
    $region14: #{tpu_custom_call.1} parent=1 // pred_check
      _
    $region15: #{tpu_custom_call.1} parent=1 // pred_check_branch
      %28 = sbr.rel (0) target = $region17
    $region16: #{tpu_custom_call.1} parent=1 // pred_region
      _
    $region17: #{tpu_custom_call.1} parent=1 // pred_fallthru
      _
    // Predicated region
    $region18: #{tpu_custom_call.1} parent=1 // pred_check
      _
    $region19: #{tpu_custom_call.1} parent=1 // pred_check_branch
      %30 = sbr.rel (0) target = $region21
    $region20: #{tpu_custom_call.1} parent=1 // pred_region
      _
    $region21: #{tpu_custom_call.1} parent=1 // pred_fallthru
      _
    // Predicated region
    $region22: #{tpu_custom_call.1} parent=1 // pred_check
      _
    $region23: #{tpu_custom_call.1} parent=1 // pred_check_branch
      %32 = sbr.rel (0) target = $region25
    $region24: #{tpu_custom_call.1} parent=1 // pred_region
      %34 = dma.done [#allocation3], 16
    $region25: #{tpu_custom_call.1} parent=1 // pred_fallthru
      _
    %v36 = vld [vmem:[#allocation2] sm:$0x1]
    %v37 = vld [vmem:[%s1] sm:$0xf]
    %v38 = vld [vmem:[%s1 + $0x4] sm:$0xf]
    %v41 = vunpack.c.l.b16 %v37
    %v42 = vunpack.c.l.b16 %v38
    %v43 = vpack.c.b16 %v42, %v41
    %vm44 = vcmask 261120
    %v46 = vsel %vm44, %v36, 0
    %v49 = vsel %vm44, %v43, 0
    %51 = vmatpush.bf16.xpose.msra.mxu0 0
    %52 = vmatpush.bf16.xpose.msra.mxu0 0
    %53 = vmatpush.bf16.xpose.msra.mxu0 0
    %54 = vmatpush.bf16.xpose.msra.mxu0 0
    %55 = vmatpush.bf16.xpose.msra.mxu0 0
    %56 = vmatpush.bf16.xpose.msra.mxu0 0
    %57 = vmatpush.bf16.xpose.msra.mxu0 0
    %58 = vmatpush.bf16.xpose.msra.mxu0 %v49
    %59 = vmatmul.bf16.gmra.mxu0 %v46
    %v60 = vpop.f32.mrf.mxu0
    %v61 = vadd.f32 0.0, %v60
    %v62 = vpop.f32.mrf.mxu0
    %63 = vdwg.mxu0
    %v64 = vld [vmem:[%s2] sm:$0xf]
    %v66 = vsel %vm44, %v64, 0
    %68 = vmatpush.bf16.xpose.msra.mxu0 0
    %69 = vmatpush.bf16.xpose.msra.mxu0 0
    %70 = vmatpush.bf16.xpose.msra.mxu0 0
    %71 = vmatpush.bf16.xpose.msra.mxu0 0
    %72 = vmatpush.bf16.xpose.msra.mxu0 0
    %73 = vmatpush.bf16.xpose.msra.mxu0 0
    %74 = vmatpush.bf16.xpose.msra.mxu0 0
    %75 = vmatpush.bf16.xpose.msra.mxu0 %v66
    %76 = vmatmul.bf16.gmra.mxu0 %v46
    %v77 = vpop.f32.mrf.mxu0
    %v78 = vadd.f32 0.0, %v77
    %v79 = vpop.f32.mrf.mxu0
    %80 = vdwg.mxu0
    %v81 = vld [vmem:[%s3] sm:$0xf]
    %v82 = vld [vmem:[%s3 + $0x4] sm:$0xf]
    %v83 = vpack.c.bf16 %v78, %v78
    %v86 = vunpack.c.l.b16 %v81
    %v87 = vunpack.c.l.b16 %v82
    %v88 = vpack.c.b16 %v87, %v86
    %vm89 = vcmask 64512
    %v91 = vsel %vm89, %v83, 0
    %v94 = vsel %vm89, %v88, 0
    %96 = vmatpush.bf16.xpose.msra.mxu0 0
    %97 = vmatpush.bf16.xpose.msra.mxu0 0
    %98 = vmatpush.bf16.xpose.msra.mxu0 0
    %99 = vmatpush.bf16.xpose.msra.mxu0 0
    %100 = vmatpush.bf16.xpose.msra.mxu0 0
    %101 = vmatpush.bf16.xpose.msra.mxu0 0
    %102 = vmatpush.bf16.xpose.msra.mxu0 0
    %103 = vmatpush.bf16.xpose.msra.mxu0 %v94
    %104 = vmatmul.bf16.gmra.mxu0 %v91
    %v105 = vpop.f32.mrf.mxu0
    %v106 = vadd.f32 0.0, %v105
    %v107 = vpop.f32.mrf.mxu0
    %108 = vdwg.mxu0
    %v109 = vsub.f32 %v61, %v106
    %v110 = vld [vmem:[%s4] sm:$0x1]
    %v112 = vperm.slane %v110, 0
    %v114 = vadd.f32 %v109, %v112
    %vm115 = vcmask 123904
    %116 = vst.msk [vmem:[#allocation5] sm:$0x3] %vm115, %v114
    // Predicated region
    $region26: #{tpu_custom_call.1} parent=1 // pred_check
      _
    $region27: #{tpu_custom_call.1} parent=1 // pred_check_branch
      %118 = sbr.rel (0) target = $region29
    $region28: #{tpu_custom_call.1} parent=1 // pred_region
      %120 = vsyncadd [#allocation4], 0
      %s122 = sshll.u32 [#allocation5], 4
      %s123 = int_to_ptr.vmem [resolvable:$true] %s122
      %s124 = sshll.u32 %s5, 4
      %s125 = int_to_ptr.hbm [resolvable:$true] %s124
      %127 = dma.vmem_to_hbm [thread:$0]  %s123, 32, %s125, [#allocation4]
    $region29: #{tpu_custom_call.1} parent=1 // pred_fallthru
      _
    // Predicated region
    $region30: #{tpu_custom_call.1} parent=1 // pred_check
      _
    $region31: #{tpu_custom_call.1} parent=1 // pred_check_branch
      %129 = sbr.rel (0) target = $region33
    $region32: #{tpu_custom_call.1} parent=1 // pred_region
      %131 = dma.done [#allocation4], 32
    $region33: #{tpu_custom_call.1} parent=1 // pred_fallthru
      _
    %132 = vsyncpa [#allocation3], 1
    %133 = vsyncpa [#allocation4], 1

</llo_original>
